<compile_context>
chip_gen: v7x
topology: tpu7x:2x2x1
jax: 0.10.0
libtpu: 0.0.40
codegen_flags: <defaults>
</compile_context>

<pallas_src>
import functools

import jax
import jax.numpy as jnp
from jax.experimental import pallas as pl
from jax.experimental.pallas import tpu as pltpu


def _round_up(x, m):
    return ((x + m - 1) // m) * m


def _dprnn_kernel(x_ref, u_ref,
                  w1_ref, b1_ref, w2_ref, b2_ref, w3_ref, b3_ref,
                  o_ref, *, dropout_prob):
    # x_ref: (TB, in_pad) bf16; weights bf16; biases f32; u_ref: (TB, emb_pad) f32 uniforms.
    x = x_ref[...]

    # mlp: Linear -> ReLU -> Linear -> ReLU  (bf16 MXU matmuls, f32 accumulate)
    h1 = jnp.dot(x, w1_ref[...], preferred_element_type=jnp.float32) + b1_ref[...]
    h1 = jnp.maximum(h1, 0.0)
    h2 = jnp.dot(h1.astype(w2_ref.dtype), w2_ref[...],
                 preferred_element_type=jnp.float32) + b2_ref[...]
    h2 = jnp.maximum(h2, 0.0)

    # dropout (training-mode semantics, as used by MC-dropout predict())
    if dropout_prob >= 1.0:
        h2 = jnp.zeros_like(h2)
    elif dropout_prob > 0.0:
        keep = u_ref[...] >= jnp.float32(dropout_prob)
        h2 = jnp.where(keep, h2 * (1.0 / (1.0 - dropout_prob)), 0.0)

    # out: Linear(embedding_size, output_size * horizon)  (lane-dense padded output)
    out = jnp.dot(h2.astype(w3_ref.dtype), w3_ref[...],
                  preferred_element_type=jnp.float32) + b3_ref[...]
    o_ref[...] = out.astype(o_ref.dtype)


def dprnn_forward(x, params, *, dropout_prob=0.5, seed=0, num_samples=1, tb=256):
    """Pallas forward for DPRNN.

    x: (B, input_size) float32.
    num_samples > 1 folds that many MC-dropout forward passes into a single pallas_call
    (as used by DPRNN.predict); returns (num_samples, B, out_dim) in that case.
    """
    w1, b1, w2, b2, w3, b3 = params
    B, in_dim = x.shape
    emb = w1.shape[1]
    out_dim = w3.shape[1]

    # Pad feature dims to the 128-lane width (zero padding keeps the math exact).
    in_pad = _round_up(in_dim, 128)
    emb_pad = _round_up(emb, 128)
    out_pad = _round_up(out_dim, 128)

    rows = num_samples * B
    TB = min(tb, _round_up(rows, 8))        # batch tile, multiple of 8 sublanes
    rows_pad = _round_up(rows, TB)
    n_tiles = rows_pad // TB

    # Replicate x for MC samples, zero-pad rows/cols, cast to bf16 for the MXU.
    x_rep = jnp.tile(x, (num_samples, 1)) if num_samples > 1 else x
    x_p = jnp.zeros((rows_pad, in_pad), jnp.bfloat16)
    x_p = x_p.at[:rows, :in_dim].set(x_rep.astype(jnp.bfloat16))

    def pad_w(w, r, c):
        out = jnp.zeros((r, c), jnp.bfloat16)
        return out.at[:w.shape[0], :w.shape[1]].set(w.astype(jnp.bfloat16))

    def pad_b(b, c):
        out = jnp.zeros((1, c), jnp.float32)
        return out.at[0, :b.shape[0]].set(b.astype(jnp.float32))

    w1p, b1p = pad_w(w1, in_pad, emb_pad), pad_b(b1, emb_pad)
    w2p, b2p = pad_w(w2, emb_pad, emb_pad), pad_b(b2, emb_pad)
    w3p, b3p = pad_w(w3, emb_pad, out_pad), pad_b(b3, out_pad)

    # Per-row dropout uniforms (portable: works on TPU and in interpret mode, and gives
    # every batch row / MC sample an independent mask).
    u = jax.random.uniform(jax.random.PRNGKey(seed), (rows_pad, emb_pad),
                           dtype=jnp.float32)

    kernel = functools.partial(_dprnn_kernel, dropout_prob=float(dropout_prob))

    out = pl.pallas_call(
        kernel,
        out_shape=jax.ShapeDtypeStruct((rows_pad, out_pad), jnp.float32),
        grid=(n_tiles,),
        in_specs=[
            pl.BlockSpec((TB, in_pad), lambda i: (i, 0)),        # x tile
            pl.BlockSpec((TB, emb_pad), lambda i: (i, 0)),       # dropout uniforms tile
            pl.BlockSpec((in_pad, emb_pad), lambda i: (0, 0)),   # w1 (VMEM-resident)
            pl.BlockSpec((1, emb_pad), lambda i: (0, 0)),        # b1
            pl.BlockSpec((emb_pad, emb_pad), lambda i: (0, 0)),  # w2
            pl.BlockSpec((1, emb_pad), lambda i: (0, 0)),        # b2
            pl.BlockSpec((emb_pad, out_pad), lambda i: (0, 0)),  # w3
            pl.BlockSpec((1, out_pad), lambda i: (0, 0)),        # b3
        ],
        out_specs=pl.BlockSpec((TB, out_pad), lambda i: (i, 0)),
        compiler_params=pltpu.CompilerParams(
            dimension_semantics=("parallel",),
            vmem_limit_bytes=32 * 1024 * 1024,
        ),
    )(x_p, u, w1p, b1p, w2p, b2p, w3p, b3p)

    out = out[:rows, :out_dim]                 # drop row/lane padding
    if num_samples > 1:
        out = out.reshape(num_samples, B, out_dim)
    return out


def init_params(key, input_size, embedding_size, output_size, horizon):
    """Deterministic PyTorch-Linear-style init: U(-1/sqrt(fan_in), 1/sqrt(fan_in))."""
    def linear(key, fan_in, fan_out):
        k_w, k_b = jax.random.split(key)
        bound = 1.0 / (fan_in ** 0.5)
        w = jax.random.uniform(k_w, (fan_in, fan_out), jnp.float32, -bound, bound)
        b = jax.random.uniform(k_b, (fan_out,), jnp.float32, -bound, bound)
        return w, b

    k1, k2, k3 = jax.random.split(key, 3)
    w1, b1 = linear(k1, input_size, embedding_size)
    w2, b2 = linear(k2, embedding_size, embedding_size)
    w3, b3 = linear(k3, embedding_size, output_size * horizon)
    return (w1, b1, w2, b2, w3, b3)


def _reference_no_dropout(x, params):
    w1, b1, w2, b2, w3, b3 = params
    h = jnp.maximum(x @ w1 + b1, 0.0)
    h = jnp.maximum(h @ w2 + b2, 0.0)
    return h @ w3 + b3


# TODO(synk): fit() (Adam training loop) and predict()'s numpy/scipy confidence-interval
# statistics are host-side driver code, not kernel work; only forward() is implemented here.

if __name__ == "__main__":
    # small shapes consistent with the module (configurable input_size, defaults horizon=2)
    B, input_size, embedding_size, output_size, horizon = 8, 4, 32, 1, 2
    dropout_prob = 0.5

    key = jax.random.PRNGKey(0)
    k_x, k_p = jax.random.split(key)
    x = jax.random.normal(k_x, (B, input_size), dtype=jnp.float32)
    params = init_params(k_p, input_size, embedding_size, output_size, horizon)

    # sanity check: dropout disabled -> must match pure-JAX f32 reference (bf16 matmul tolerance)
    out_nodrop = dprnn_forward(x, params, dropout_prob=0.0, seed=0)
    jax.block_until_ready(out_nodrop)
    ref = _reference_no_dropout(x, params)
    assert out_nodrop.shape == (B, output_size * horizon)
    assert jnp.allclose(out_nodrop, ref, atol=3e-2, rtol=3e-2)

    # full forward with dropout active (training-mode semantics)
    out = dprnn_forward(x, params, dropout_prob=dropout_prob, seed=0)
    jax.block_until_ready(out)
    assert out.shape == (B, output_size * horizon)
    assert jnp.all(jnp.isfinite(out))

    # MC-dropout predict(): 4 stochastic samples folded into a single pallas_call
    mc = dprnn_forward(x, params, dropout_prob=dropout_prob, seed=1, num_samples=4)
    jax.block_until_ready(mc)
    assert mc.shape == (4, B, output_size * horizon)
    assert jnp.all(jnp.isfinite(mc))

    print("KERNEL_OK")
</pallas_src>

<mosaic_0001>
module attributes {stable_mosaic.version = 11 : i64} {
  func.func @_dprnn_kernel(%arg0: i32, %arg1: memref<8x128xbf16, #tpu.memory_space<vmem>>, %arg2: memref<8x128xf32, #tpu.memory_space<vmem>>, %arg3: memref<128x128xbf16, #tpu.memory_space<vmem>>, %arg4: memref<1x128xf32, #tpu.memory_space<vmem>>, %arg5: memref<128x128xbf16, #tpu.memory_space<vmem>>, %arg6: memref<1x128xf32, #tpu.memory_space<vmem>>, %arg7: memref<128x128xbf16, #tpu.memory_space<vmem>>, %arg8: memref<1x128xf32, #tpu.memory_space<vmem>>, %arg9: memref<8x128xf32, #tpu.memory_space<vmem>>) attributes {dimension_semantics = [#tpu.dimension_semantics<parallel>], iteration_bounds = array<i64: 1>, scalar_prefetch = 0 : i64, scratch_operands = 0 : i64, tpu.core_type = #tpu.core_type<tc>, window_params = [{transform_indices = @transform_0, window_bounds = array<i64: 8, 128>}, {transform_indices = @transform_1, window_bounds = array<i64: 8, 128>}, {pipeline_mode = #tpu.pipeline_mode<synchronous>, transform_indices = @transform_2, window_bounds = array<i64: 128, 128>}, {pipeline_mode = #tpu.pipeline_mode<synchronous>, transform_indices = @transform_3, window_bounds = array<i64: 1, 128>}, {pipeline_mode = #tpu.pipeline_mode<synchronous>, transform_indices = @transform_4, window_bounds = array<i64: 128, 128>}, {pipeline_mode = #tpu.pipeline_mode<synchronous>, transform_indices = @transform_5, window_bounds = array<i64: 1, 128>}, {pipeline_mode = #tpu.pipeline_mode<synchronous>, transform_indices = @transform_6, window_bounds = array<i64: 128, 128>}, {pipeline_mode = #tpu.pipeline_mode<synchronous>, transform_indices = @transform_7, window_bounds = array<i64: 1, 128>}, {transform_indices = @transform_8, window_bounds = array<i64: 8, 128>}]} {
    %c0 = arith.constant 0 : index
    %c0_0 = arith.constant 0 : index
    %0 = vector.load %arg1[%c0, %c0_0] : memref<8x128xbf16, #tpu.memory_space<vmem>>, vector<8x128xbf16>
    %c0_1 = arith.constant 0 : index
    %c0_2 = arith.constant 0 : index
    %1 = vector.load %arg3[%c0_1, %c0_2] : memref<128x128xbf16, #tpu.memory_space<vmem>>, vector<128x128xbf16>
    %cst = arith.constant dense<0.000000e+00> : vector<8x128xf32>
    %2 = tpu.matmul %0, %1, %cst {dimension_numbers = #tpu.dot_dimension_numbers<[1], [0], [0], [1], [0, 0, 1, 1], [], []>} : vector<8x128xbf16>, vector<128x128xbf16>, vector<8x128xf32> -> vector<8x128xf32>
    %c0_3 = arith.constant 0 : index
    %c0_4 = arith.constant 0 : index
    %3 = vector.load %arg4[%c0_3, %c0_4] : memref<1x128xf32, #tpu.memory_space<vmem>>, vector<1x128xf32>
    %4 = vector.broadcast %3 : vector<1x128xf32> to vector<8x128xf32>
    %5 = arith.addf %2, %4 : vector<8x128xf32>
    %cst_5 = arith.constant 0.000000e+00 : f32
    %6 = vector.broadcast %cst_5 : f32 to vector<8x128xf32>
    %7 = arith.maximumf %5, %6 : vector<8x128xf32>
    %8 = arith.truncf %7 : vector<8x128xf32> to vector<8x128xbf16>
    %c0_6 = arith.constant 0 : index
    %c0_7 = arith.constant 0 : index
    %9 = vector.load %arg5[%c0_6, %c0_7] : memref<128x128xbf16, #tpu.memory_space<vmem>>, vector<128x128xbf16>
    %cst_8 = arith.constant dense<0.000000e+00> : vector<8x128xf32>
    %10 = tpu.matmul %8, %9, %cst_8 {dimension_numbers = #tpu.dot_dimension_numbers<[1], [0], [0], [1], [0, 0, 1, 1], [], []>} : vector<8x128xbf16>, vector<128x128xbf16>, vector<8x128xf32> -> vector<8x128xf32>
    %c0_9 = arith.constant 0 : index
    %c0_10 = arith.constant 0 : index
    %11 = vector.load %arg6[%c0_9, %c0_10] : memref<1x128xf32, #tpu.memory_space<vmem>>, vector<1x128xf32>
    %12 = vector.broadcast %11 : vector<1x128xf32> to vector<8x128xf32>
    %13 = arith.addf %10, %12 : vector<8x128xf32>
    %cst_11 = arith.constant 0.000000e+00 : f32
    %14 = vector.broadcast %cst_11 : f32 to vector<8x128xf32>
    %15 = arith.maximumf %13, %14 : vector<8x128xf32>
    %16 = arith.truncf %15 : vector<8x128xf32> to vector<8x128xbf16>
    %c0_12 = arith.constant 0 : index
    %c0_13 = arith.constant 0 : index
    %17 = vector.load %arg7[%c0_12, %c0_13] : memref<128x128xbf16, #tpu.memory_space<vmem>>, vector<128x128xbf16>
    %cst_14 = arith.constant dense<0.000000e+00> : vector<8x128xf32>
    %18 = tpu.matmul %16, %17, %cst_14 {dimension_numbers = #tpu.dot_dimension_numbers<[1], [0], [0], [1], [0, 0, 1, 1], [], []>} : vector<8x128xbf16>, vector<128x128xbf16>, vector<8x128xf32> -> vector<8x128xf32>
    %c0_15 = arith.constant 0 : index
    %c0_16 = arith.constant 0 : index
    %19 = vector.load %arg8[%c0_15, %c0_16] : memref<1x128xf32, #tpu.memory_space<vmem>>, vector<1x128xf32>
    %20 = vector.broadcast %19 : vector<1x128xf32> to vector<8x128xf32>
    %21 = arith.addf %18, %20 : vector<8x128xf32>
    %c0_17 = arith.constant 0 : index
    %c0_18 = arith.constant 0 : index
    %22 = vector.load %arg9[%c0_17, %c0_18] : memref<8x128xf32, #tpu.memory_space<vmem>>, vector<8x128xf32>
    tpu.vector_store %arg9[%c0_17, %c0_18], %21 {strides = array<i32>} : memref<8x128xf32, #tpu.memory_space<vmem>>, vector<8x128xf32>,
    return
  }
  func.func @transform_0(%arg0: i32) -> (i32, i32) {
    %c0_i32 = arith.constant 0 : i32
    %c0_i32_0 = arith.constant 0 : i32
    return %arg0, %c0_i32 : i32, i32
  }
  func.func @transform_1(%arg0: i32) -> (i32, i32) {
    %c0_i32 = arith.constant 0 : i32
    %c0_i32_0 = arith.constant 0 : i32
    return %arg0, %c0_i32 : i32, i32
  }
  func.func @transform_2(%arg0: i32) -> (i32, i32) {
    %c0_i32 = arith.constant 0 : i32
    %c0_i32_0 = arith.constant 0 : i32
    %c0_i32_1 = arith.constant 0 : i32
    return %c0_i32, %c0_i32_0 : i32, i32
  }
  func.func @transform_3(%arg0: i32) -> (i32, i32) {
    %c0_i32 = arith.constant 0 : i32
    %c0_i32_0 = arith.constant 0 : i32
    %c0_i32_1 = arith.constant 0 : i32
    return %c0_i32, %c0_i32_0 : i32, i32
  }
  func.func @transform_4(%arg0: i32) -> (i32, i32) {
    %c0_i32 = arith.constant 0 : i32
    %c0_i32_0 = arith.constant 0 : i32
    %c0_i32_1 = arith.constant 0 : i32
    return %c0_i32, %c0_i32_0 : i32, i32
  }
  func.func @transform_5(%arg0: i32) -> (i32, i32) {
    %c0_i32 = arith.constant 0 : i32
    %c0_i32_0 = arith.constant 0 : i32
    %c0_i32_1 = arith.constant 0 : i32
    return %c0_i32, %c0_i32_0 : i32, i32
  }
  func.func @transform_6(%arg0: i32) -> (i32, i32) {
    %c0_i32 = arith.constant 0 : i32
    %c0_i32_0 = arith.constant 0 : i32
    %c0_i32_1 = arith.constant 0 : i32
    return %c0_i32, %c0_i32_0 : i32, i32
  }
  func.func @transform_7(%arg0: i32) -> (i32, i32) {
    %c0_i32 = arith.constant 0 : i32
    %c0_i32_0 = arith.constant 0 : i32
    %c0_i32_1 = arith.constant 0 : i32
    return %c0_i32, %c0_i32_0 : i32, i32
  }
  func.func @transform_8(%arg0: i32) -> (i32, i32) {
    %c0_i32 = arith.constant 0 : i32
    %c0_i32_0 = arith.constant 0 : i32
    return %arg0, %c0_i32 : i32, i32
  }
}

</mosaic_0001>

<llo_original>
// kernel: tpu_custom_call.1
$region0: #{tpu_custom_call.1}
  #allocation0 [shape = 'u32[]', space=smem, size = 0x4, offset = 0x4, fixed_abs, tag = 'smem constant byte address 0x4 - core index']
  #allocation1 [shape = 'u32[144,128]{1,0:T(1,128)}', space=vmem, size = 0x12000, scoped, tag = 'internal scratch']
  %s0 = inlined_call_operand.hbm [shape: bf16[8,128], index: 0, kind: input, shape index: {}]
  %s1 = inlined_call_operand.hbm [shape: f32[8,128], index: 1, kind: input, shape index: {}]
  %s2 = inlined_call_operand.hbm [shape: bf16[128,128], index: 2, kind: input, shape index: {}]
  %s3 = inlined_call_operand.vmem [shape: f32[1,128], index: 3, kind: input, shape index: {}]
  %s4 = inlined_call_operand.hbm [shape: bf16[128,128], index: 4, kind: input, shape index: {}]
  %s5 = inlined_call_operand.vmem [shape: f32[1,128], index: 5, kind: input, shape index: {}]
  %s6 = inlined_call_operand.hbm [shape: bf16[128,128], index: 6, kind: input, shape index: {}]
  %s7 = inlined_call_operand.vmem [shape: f32[1,128], index: 7, kind: input, shape index: {}]
  %s8 = inlined_call_operand.hbm [shape: f32[8,128], index: 8, kind: output, shape index: {}]
  %s9 = sld [smem:[#allocation0]]
  $region62: #{tpu_custom_call.1} parent=0
    _
  %s11 = ssub.s32 1, %s9
  %s12 = scalar_select 0, %s11, %s9
  $region1: #{tpu_custom_call.1} parent=0
    #allocation2 [shape = 'u8[2048]{0}', space=vmem, size = 0x800, scoped, tag = 'input window, operand 0, single buffered']
    #allocation3 [shape = 's32[1]{0}', space=sflag, size = 0x4, scoped, tag = 'scoped memory for tpu_custom_call.1']
    #allocation4 [shape = 's32[1]{0}', space=sflag, size = 0x4, scoped, tag = 'scoped memory for tpu_custom_call.1']
    #allocation5 [shape = 'u8[4096]{0}', space=vmem, size = 0x1000, scoped, tag = 'input window, operand 1, single buffered']
    #allocation6 [shape = 's32[1]{0}', space=sflag, size = 0x4, scoped, tag = 'scoped memory for tpu_custom_call.1']
    #allocation7 [shape = 'u8[32768]{0}', space=vmem, size = 0x8000, scoped, tag = 'input window, operand 2, single buffered']
    #allocation8 [shape = 'u8[32768]{0}', space=vmem, size = 0x8000, scoped, tag = 'input window, operand 4, single buffered']
    #allocation9 [shape = 's32[1]{0}', space=sflag, size = 0x4, scoped, tag = 'scoped memory for tpu_custom_call.1']
    #allocation10 [shape = 'u8[32768]{0}', space=vmem, size = 0x8000, scoped, tag = 'input window, operand 6, single buffered']
    #allocation11 [shape = 'u8[4096]{0}', space=vmem, size = 0x1000, scoped, tag = 'output window, operand 0, single buffered']
    %13 = vsyncpa [#allocation3], 0
    %14 = vsyncpa [#allocation6], 0
    %15 = vsyncpa [#allocation9], 0
    %16 = vsyncpa [#allocation4], 0
    // Predicated region
    $region2: #{tpu_custom_call.1} parent=1 // pred_check
      _
    $region3: #{tpu_custom_call.1} parent=1 // pred_check_branch
      %18 = sbr.rel (0) target = $region5
    $region4: #{tpu_custom_call.1} parent=1 // pred_region
      %s20 = ssub.s32 64, 64
      %21 = vsyncadd [#allocation3], %s20
      %s23 = sshll.u32 [#allocation2], 4
      %s24 = int_to_ptr.vmem [resolvable:$true] %s23
      %26 = dma.hbm_to_vmem [thread:$0]  %s0, 64, %s24, [#allocation3]
    $region5: #{tpu_custom_call.1} parent=1 // pred_fallthru
      _
    // Predicated region
    $region6: #{tpu_custom_call.1} parent=1 // pred_check
      _
    $region7: #{tpu_custom_call.1} parent=1 // pred_check_branch
      %28 = sbr.rel (0) target = $region9
    $region8: #{tpu_custom_call.1} parent=1 // pred_region
      %s30 = ssub.s32 128, 128
      %31 = vsyncadd [#allocation6], %s30
      %s33 = sshll.u32 [#allocation5], 4
      %s34 = int_to_ptr.vmem [resolvable:$true] %s33
      %36 = dma.hbm_to_vmem [thread:$0]  %s1, 128, %s34, [#allocation6]
    $region9: #{tpu_custom_call.1} parent=1 // pred_fallthru
      _
    // Predicated region
    $region10: #{tpu_custom_call.1} parent=1 // pred_check
      _
    $region11: #{tpu_custom_call.1} parent=1 // pred_check_branch
      %38 = sbr.rel (0) target = $region13
    $region12: #{tpu_custom_call.1} parent=1 // pred_region
      %s40 = ssub.s32 1024, 1024
      %41 = vsyncadd [#allocation6], %s40
      %s42 = sshll.u32 [#allocation7], 4
      %s43 = int_to_ptr.vmem [resolvable:$true] %s42
      %48 = dma.hbm_to_vmem [thread:$0]  %s2, 1024, %s43, [#allocation6], 64, 64, 4
    $region13: #{tpu_custom_call.1} parent=1 // pred_fallthru
      _
    // Predicated region
    $region14: #{tpu_custom_call.1} parent=1 // pred_check
      _
    $region15: #{tpu_custom_call.1} parent=1 // pred_check_branch
      %50 = sbr.rel (0) target = $region17
    $region16: #{tpu_custom_call.1} parent=1 // pred_region
      _
    $region17: #{tpu_custom_call.1} parent=1 // pred_fallthru
      _
    // Predicated region
    $region18: #{tpu_custom_call.1} parent=1 // pred_check
      _
    $region19: #{tpu_custom_call.1} parent=1 // pred_check_branch
      %52 = sbr.rel (0) target = $region21
    $region20: #{tpu_custom_call.1} parent=1 // pred_region
      %s54 = ssub.s32 1024, 1024
      %55 = vsyncadd [#allocation9], %s54
      %s56 = sshll.u32 [#allocation8], 4
      %s57 = int_to_ptr.vmem [resolvable:$true] %s56
      %62 = dma.hbm_to_vmem [thread:$0]  %s4, 1024, %s57, [#allocation9], 64, 64, 4
    $region21: #{tpu_custom_call.1} parent=1 // pred_fallthru
      _
    // Predicated region
    $region22: #{tpu_custom_call.1} parent=1 // pred_check
      _
    $region23: #{tpu_custom_call.1} parent=1 // pred_check_branch
      %64 = sbr.rel (0) target = $region25
    $region24: #{tpu_custom_call.1} parent=1 // pred_region
      _
    $region25: #{tpu_custom_call.1} parent=1 // pred_fallthru
      _
    // Predicated region
    $region26: #{tpu_custom_call.1} parent=1 // pred_check
      _
    $region27: #{tpu_custom_call.1} parent=1 // pred_check_branch
      %66 = sbr.rel (0) target = $region29
    $region28: #{tpu_custom_call.1} parent=1 // pred_region
      %s68 = ssub.s32 1024, 1024
      %69 = vsyncadd [#allocation9], %s68
      %s70 = sshll.u32 [#allocation10], 4
      %s71 = int_to_ptr.vmem [resolvable:$true] %s70
      %76 = dma.hbm_to_vmem [thread:$0]  %s6, 1024, %s71, [#allocation9], 64, 64, 4
    $region29: #{tpu_custom_call.1} parent=1 // pred_fallthru
      _
    // Predicated region
    $region30: #{tpu_custom_call.1} parent=1 // pred_check
      _
    $region31: #{tpu_custom_call.1} parent=1 // pred_check_branch
      %78 = sbr.rel (0) target = $region33
    $region32: #{tpu_custom_call.1} parent=1 // pred_region
      _
    $region33: #{tpu_custom_call.1} parent=1 // pred_fallthru
      _
    // Predicated region
    $region34: #{tpu_custom_call.1} parent=1 // pred_check
      _
    $region35: #{tpu_custom_call.1} parent=1 // pred_check_branch
      %80 = sbr.rel (0) target = $region37
    $region36: #{tpu_custom_call.1} parent=1 // pred_region
      %81 = dma.done [#allocation3], 64
    $region37: #{tpu_custom_call.1} parent=1 // pred_fallthru
      _
    // Predicated region
    $region38: #{tpu_custom_call.1} parent=1 // pred_check
      _
    $region39: #{tpu_custom_call.1} parent=1 // pred_check_branch
      %83 = sbr.rel (0) target = $region41
    $region40: #{tpu_custom_call.1} parent=1 // pred_region
      %84 = dma.done [#allocation6], 128
    $region41: #{tpu_custom_call.1} parent=1 // pred_fallthru
      _
    // Predicated region
    $region42: #{tpu_custom_call.1} parent=1 // pred_check
      _
    $region43: #{tpu_custom_call.1} parent=1 // pred_check_branch
      %86 = sbr.rel (0) target = $region45
    $region44: #{tpu_custom_call.1} parent=1 // pred_region
      %87 = dma.done [#allocation6], 1024
    $region45: #{tpu_custom_call.1} parent=1 // pred_fallthru
      _
    // Predicated region
    $region46: #{tpu_custom_call.1} parent=1 // pred_check
      _
    $region47: #{tpu_custom_call.1} parent=1 // pred_check_branch
      %89 = sbr.rel (0) target = $region49
    $region48: #{tpu_custom_call.1} parent=1 // pred_region
      %90 = dma.done [#allocation9], 1024
    $region49: #{tpu_custom_call.1} parent=1 // pred_fallthru
      _
    // Predicated region
    $region50: #{tpu_custom_call.1} parent=1 // pred_check
      _
    $region51: #{tpu_custom_call.1} parent=1 // pred_check_branch
      %92 = sbr.rel (0) target = $region53
    $region52: #{tpu_custom_call.1} parent=1 // pred_region
      %93 = dma.done [#allocation9], 1024
    $region53: #{tpu_custom_call.1} parent=1 // pred_fallthru
      _
    %v95 = vld [vmem:[#allocation2] sm:$0xf]
    %v96 = vld [vmem:[#allocation7] sm:$0xf]
    %v97 = vld [vmem:[#allocation7 + $0x4] sm:$0xf]
    %v98 = vld [vmem:[#allocation7 + $0x8] sm:$0xf]
    %v99 = vld [vmem:[#allocation7 + $0xc] sm:$0xf]
    %v100 = vld [vmem:[#allocation7 + $0x10] sm:$0xf]
    %v101 = vld [vmem:[#allocation7 + $0x14] sm:$0xf]
    %v102 = vld [vmem:[#allocation7 + $0x18] sm:$0xf]
    %v103 = vld [vmem:[#allocation7 + $0x1c] sm:$0xf]
    %v104 = vld [vmem:[#allocation7 + $0x20] sm:$0xf]
    %v105 = vld [vmem:[#allocation7 + $0x24] sm:$0xf]
    %v106 = vld [vmem:[#allocation7 + $0x28] sm:$0xf]
    %v107 = vld [vmem:[#allocation7 + $0x2c] sm:$0xf]
    %v108 = vld [vmem:[#allocation7 + $0x30] sm:$0xf]
    %v109 = vld [vmem:[#allocation7 + $0x34] sm:$0xf]
    %v110 = vld [vmem:[#allocation7 + $0x38] sm:$0xf]
    %v111 = vld [vmem:[#allocation7 + $0x3c] sm:$0xf]
    %v112 = vld [vmem:[%s3] sm:$0x1]
    %v114 = vlaneseq
    %v115 = vshrl.u32 %v114, 7
    %v116 = vsub.s32 0, %v115
    %v117 = vrot.slane %v112, %v116
    %v135 = vunpack.c.l.b16 %v96
    %v136 = vunpack.c.l.b16 %v97
    %v137 = vunpack.c.l.b16 %v98
    %v138 = vunpack.c.l.b16 %v99
    %v139 = vunpack.c.l.b16 %v100
    %v140 = vunpack.c.l.b16 %v101
    %v141 = vunpack.c.l.b16 %v102
    %v142 = vunpack.c.l.b16 %v103
    %v143 = vunpack.c.l.b16 %v104
    %v144 = vunpack.c.l.b16 %v105
    %v145 = vunpack.c.l.b16 %v106
    %v146 = vunpack.c.l.b16 %v107
    %v147 = vunpack.c.l.b16 %v108
    %v148 = vunpack.c.l.b16 %v109
    %v149 = vunpack.c.l.b16 %v110
    %v150 = vunpack.c.l.b16 %v111
    %v151 = vpack.c.b16 %v136, %v135
    %v152 = vpack.c.b16 %v138, %v137
    %v153 = vpack.c.b16 %v140, %v139
    %v154 = vpack.c.b16 %v142, %v141
    %v155 = vpack.c.b16 %v144, %v143
    %v156 = vpack.c.b16 %v146, %v145
    %v157 = vpack.c.b16 %v148, %v147
    %v158 = vpack.c.b16 %v150, %v149
    %167 = vmatprep.subr.bf16.mxu0 0
    %168 = vmatpush1.bf16.msra.mxu0 %v151
    %169 = vmatprep.subr.bf16.mxu0 0
    %170 = vmatpush1.bf16.msra.mxu0 %v152
    %171 = vmatprep.subr.bf16.mxu0 0
    %172 = vmatpush1.bf16.msra.mxu0 %v153
    %173 = vmatprep.subr.bf16.mxu0 0
    %174 = vmatpush1.bf16.msra.mxu0 %v154
    %175 = vmatprep.subr.bf16.mxu0 0
    %176 = vmatpush1.bf16.msra.mxu0 %v155
    %177 = vmatprep.subr.bf16.mxu0 0
    %178 = vmatpush1.bf16.msra.mxu0 %v156
    %179 = vmatprep.subr.bf16.mxu0 0
    %180 = vmatpush1.bf16.msra.mxu0 %v157
    %181 = vmatprep.subr.bf16.mxu0 0
    %182 = vmatpush1.bf16.msra.mxu0 %v158
    %183 = vmatprep.subr.bf16.mxu0 0
    %184 = vmatpush1.bf16.msra.mxu0 0
    %185 = vmatprep.subr.bf16.mxu0 0
    %186 = vmatpush1.bf16.msra.mxu0 0
    %187 = vmatprep.subr.bf16.mxu0 0
    %188 = vmatpush1.bf16.msra.mxu0 0
    %189 = vmatprep.subr.bf16.mxu0 0
    %190 = vmatpush1.bf16.msra.mxu0 0
    %191 = vmatprep.subr.bf16.mxu0 0
    %192 = vmatpush1.bf16.msra.mxu0 0
    %193 = vmatprep.subr.bf16.mxu0 0
    %194 = vmatpush1.bf16.msra.mxu0 0
    %195 = vmatprep.subr.bf16.mxu0 0
    %196 = vmatpush1.bf16.msra.mxu0 0
    %197 = vmatprep.subr.bf16.mxu0 0
    %198 = vmatpush1.bf16.msra.mxu0 0
    %199 = vmatprep.mubr.bf16.mxu0 0
    %200 = vmatmul.mubr.bf16.gmra.mrb[0].mxu0 %v95
    %v201 = vpop.f32.mrb[0].mxu0
    %v202 = vadd.f32 %v117, %v201
    %v203 = vpop.f32.mrb[0].mxu0
    %v204 = vpop.f32.mrb[0].mxu0
    %v205 = vpop.f32.mrb[0].mxu0
    %206 = vdwg.mxu0
    %v207 = vmax.f32 %v202, 0.0
    %v208 = vpack.c.bf16 %v207, %v207
    %v209 = vld [vmem:[#allocation8] sm:$0xf]
    %v210 = vld [vmem:[#allocation8 + $0x4] sm:$0xf]
    %v211 = vld [vmem:[#allocation8 + $0x8] sm:$0xf]
    %v212 = vld [vmem:[#allocation8 + $0xc] sm:$0xf]
    %v213 = vld [vmem:[#allocation8 + $0x10] sm:$0xf]
    %v214 = vld [vmem:[#allocation8 + $0x14] sm:$0xf]
    %v215 = vld [vmem:[#allocation8 + $0x18] sm:$0xf]
    %v216 = vld [vmem:[#allocation8 + $0x1c] sm:$0xf]
    %v217 = vld [vmem:[#allocation8 + $0x20] sm:$0xf]
    %v218 = vld [vmem:[#allocation8 + $0x24] sm:$0xf]
    %v219 = vld [vmem:[#allocation8 + $0x28] sm:$0xf]
    %v220 = vld [vmem:[#allocation8 + $0x2c] sm:$0xf]
    %v221 = vld [vmem:[#allocation8 + $0x30] sm:$0xf]
    %v222 = vld [vmem:[#allocation8 + $0x34] sm:$0xf]
    %v223 = vld [vmem:[#allocation8 + $0x38] sm:$0xf]
    %v224 = vld [vmem:[#allocation8 + $0x3c] sm:$0xf]
    %v225 = vld [vmem:[%s5] sm:$0x1]
    %v227 = vlaneseq
    %v228 = vshrl.u32 %v227, 7
    %v229 = vsub.s32 0, %v228
    %v230 = vrot.slane %v225, %v229
    %v248 = vunpack.c.l.b16 %v209
    %v249 = vunpack.c.l.b16 %v210
    %v250 = vunpack.c.l.b16 %v211
    %v251 = vunpack.c.l.b16 %v212
    %v252 = vunpack.c.l.b16 %v213
    %v253 = vunpack.c.l.b16 %v214
    %v254 = vunpack.c.l.b16 %v215
    %v255 = vunpack.c.l.b16 %v216
    %v256 = vunpack.c.l.b16 %v217
    %v257 = vunpack.c.l.b16 %v218
    %v258 = vunpack.c.l.b16 %v219
    %v259 = vunpack.c.l.b16 %v220
    %v260 = vunpack.c.l.b16 %v221
    %v261 = vunpack.c.l.b16 %v222
    %v262 = vunpack.c.l.b16 %v223
    %v263 = vunpack.c.l.b16 %v224
    %v264 = vpack.c.b16 %v249, %v248
    %v265 = vpack.c.b16 %v251, %v250
    %v266 = vpack.c.b16 %v253, %v252
    %v267 = vpack.c.b16 %v255, %v254
    %v268 = vpack.c.b16 %v257, %v256
    %v269 = vpack.c.b16 %v259, %v258
    %v270 = vpack.c.b16 %v261, %v260
    %v271 = vpack.c.b16 %v263, %v262
    %280 = vmatprep.subr.bf16.mxu0 0
    %281 = vmatpush1.bf16.msra.mxu0 %v264
    %282 = vmatprep.subr.bf16.mxu0 0
    %283 = vmatpush1.bf16.msra.mxu0 %v265
    %284 = vmatprep.subr.bf16.mxu0 0
    %285 = vmatpush1.bf16.msra.mxu0 %v266
    %286 = vmatprep.subr.bf16.mxu0 0
    %287 = vmatpush1.bf16.msra.mxu0 %v267
    %288 = vmatprep.subr.bf16.mxu0 0
    %289 = vmatpush1.bf16.msra.mxu0 %v268
    %290 = vmatprep.subr.bf16.mxu0 0
    %291 = vmatpush1.bf16.msra.mxu0 %v269
    %292 = vmatprep.subr.bf16.mxu0 0
    %293 = vmatpush1.bf16.msra.mxu0 %v270
    %294 = vmatprep.subr.bf16.mxu0 0
    %295 = vmatpush1.bf16.msra.mxu0 %v271
    %296 = vmatprep.subr.bf16.mxu0 0
    %297 = vmatpush1.bf16.msra.mxu0 0
    %298 = vmatprep.subr.bf16.mxu0 0
    %299 = vmatpush1.bf16.msra.mxu0 0
    %300 = vmatprep.subr.bf16.mxu0 0
    %301 = vmatpush1.bf16.msra.mxu0 0
    %302 = vmatprep.subr.bf16.mxu0 0
    %303 = vmatpush1.bf16.msra.mxu0 0
    %304 = vmatprep.subr.bf16.mxu0 0
    %305 = vmatpush1.bf16.msra.mxu0 0
    %306 = vmatprep.subr.bf16.mxu0 0
    %307 = vmatpush1.bf16.msra.mxu0 0
    %308 = vmatprep.subr.bf16.mxu0 0
    %309 = vmatpush1.bf16.msra.mxu0 0
    %310 = vmatprep.subr.bf16.mxu0 0
    %311 = vmatpush1.bf16.msra.mxu0 0
    %312 = vmatprep.mubr.bf16.mxu0 0
    %313 = vmatmul.mubr.bf16.gmra.mrb[0].mxu0 %v208
    %v314 = vpop.f32.mrb[0].mxu0
    %v315 = vadd.f32 %v230, %v314
    %v316 = vpop.f32.mrb[0].mxu0
    %v317 = vpop.f32.mrb[0].mxu0
    %v318 = vpop.f32.mrb[0].mxu0
    %319 = vdwg.mxu0
    %v320 = vmax.f32 %v315, 0.0
    %v321 = vpack.c.bf16 %v320, %v320
    %v322 = vld [vmem:[#allocation10] sm:$0xf]
    %v323 = vld [vmem:[#allocation10 + $0x4] sm:$0xf]
    %v324 = vld [vmem:[#allocation10 + $0x8] sm:$0xf]
    %v325 = vld [vmem:[#allocation10 + $0xc] sm:$0xf]
    %v326 = vld [vmem:[#allocation10 + $0x10] sm:$0xf]
    %v327 = vld [vmem:[#allocation10 + $0x14] sm:$0xf]
    %v328 = vld [vmem:[#allocation10 + $0x18] sm:$0xf]
    %v329 = vld [vmem:[#allocation10 + $0x1c] sm:$0xf]
    %v330 = vld [vmem:[#allocation10 + $0x20] sm:$0xf]
    %v331 = vld [vmem:[#allocation10 + $0x24] sm:$0xf]
    %v332 = vld [vmem:[#allocation10 + $0x28] sm:$0xf]
    %v333 = vld [vmem:[#allocation10 + $0x2c] sm:$0xf]
    %v334 = vld [vmem:[#allocation10 + $0x30] sm:$0xf]
    %v335 = vld [vmem:[#allocation10 + $0x34] sm:$0xf]
    %v336 = vld [vmem:[#allocation10 + $0x38] sm:$0xf]
    %v337 = vld [vmem:[#allocation10 + $0x3c] sm:$0xf]
    %v338 = vld [vmem:[%s7] sm:$0x1]
    %v340 = vlaneseq
    %v341 = vshrl.u32 %v340, 7
    %v342 = vsub.s32 0, %v341
    %v343 = vrot.slane %v338, %v342
    %v361 = vunpack.c.l.b16 %v322
    %v362 = vunpack.c.l.b16 %v323
    %v363 = vunpack.c.l.b16 %v324
    %v364 = vunpack.c.l.b16 %v325
    %v365 = vunpack.c.l.b16 %v326
    %v366 = vunpack.c.l.b16 %v327
    %v367 = vunpack.c.l.b16 %v328
    %v368 = vunpack.c.l.b16 %v329
    %v369 = vunpack.c.l.b16 %v330
    %v370 = vunpack.c.l.b16 %v331
    %v371 = vunpack.c.l.b16 %v332
    %v372 = vunpack.c.l.b16 %v333
    %v373 = vunpack.c.l.b16 %v334
    %v374 = vunpack.c.l.b16 %v335
    %v375 = vunpack.c.l.b16 %v336
    %v376 = vunpack.c.l.b16 %v337
    %v377 = vpack.c.b16 %v362, %v361
    %v378 = vpack.c.b16 %v364, %v363
    %v379 = vpack.c.b16 %v366, %v365
    %v380 = vpack.c.b16 %v368, %v367
    %v381 = vpack.c.b16 %v370, %v369
    %v382 = vpack.c.b16 %v372, %v371
    %v383 = vpack.c.b16 %v374, %v373
    %v384 = vpack.c.b16 %v376, %v375
    %393 = vmatprep.subr.bf16.mxu0 0
    %394 = vmatpush1.bf16.msra.mxu0 %v377
    %395 = vmatprep.subr.bf16.mxu0 0
    %396 = vmatpush1.bf16.msra.mxu0 %v378
    %397 = vmatprep.subr.bf16.mxu0 0
    %398 = vmatpush1.bf16.msra.mxu0 %v379
    %399 = vmatprep.subr.bf16.mxu0 0
    %400 = vmatpush1.bf16.msra.mxu0 %v380
    %401 = vmatprep.subr.bf16.mxu0 0
    %402 = vmatpush1.bf16.msra.mxu0 %v381
    %403 = vmatprep.subr.bf16.mxu0 0
    %404 = vmatpush1.bf16.msra.mxu0 %v382
    %405 = vmatprep.subr.bf16.mxu0 0
    %406 = vmatpush1.bf16.msra.mxu0 %v383
    %407 = vmatprep.subr.bf16.mxu0 0
    %408 = vmatpush1.bf16.msra.mxu0 %v384
    %409 = vmatprep.subr.bf16.mxu0 0
    %410 = vmatpush1.bf16.msra.mxu0 0
    %411 = vmatprep.subr.bf16.mxu0 0
    %412 = vmatpush1.bf16.msra.mxu0 0
    %413 = vmatprep.subr.bf16.mxu0 0
    %414 = vmatpush1.bf16.msra.mxu0 0
    %415 = vmatprep.subr.bf16.mxu0 0
    %416 = vmatpush1.bf16.msra.mxu0 0
    %417 = vmatprep.subr.bf16.mxu0 0
    %418 = vmatpush1.bf16.msra.mxu0 0
    %419 = vmatprep.subr.bf16.mxu0 0
    %420 = vmatpush1.bf16.msra.mxu0 0
    %421 = vmatprep.subr.bf16.mxu0 0
    %422 = vmatpush1.bf16.msra.mxu0 0
    %423 = vmatprep.subr.bf16.mxu0 0
    %424 = vmatpush1.bf16.msra.mxu0 0
    %425 = vmatprep.mubr.bf16.mxu0 0
    %426 = vmatmul.mubr.bf16.gmra.mrb[0].mxu0 %v321
    %v427 = vpop.f32.mrb[0].mxu0
    %v428 = vadd.f32 %v343, %v427
    %v429 = vpop.f32.mrb[0].mxu0
    %v430 = vpop.f32.mrb[0].mxu0
    %v431 = vpop.f32.mrb[0].mxu0
    %432 = vdwg.mxu0
    %433 = vst [vmem:[#allocation11] sm:$0xff] %v428
    // Predicated region
    $region54: #{tpu_custom_call.1} parent=1 // pred_check
      _
    $region55: #{tpu_custom_call.1} parent=1 // pred_check_branch
      %435 = sbr.rel (0) target = $region57
    $region56: #{tpu_custom_call.1} parent=1 // pred_region
      %s437 = ssub.s32 128, 128
      %438 = vsyncadd [#allocation4], %s437
      %s440 = sshll.u32 [#allocation11], 4
      %s441 = int_to_ptr.vmem [resolvable:$true] %s440
      %443 = dma.vmem_to_hbm [thread:$0]  %s441, 128, %s8, [#allocation4]
    $region57: #{tpu_custom_call.1} parent=1 // pred_fallthru
      _
    // Predicated region
    $region58: #{tpu_custom_call.1} parent=1 // pred_check
      _
    $region59: #{tpu_custom_call.1} parent=1 // pred_check_branch
      %445 = sbr.rel (0) target = $region61
    $region60: #{tpu_custom_call.1} parent=1 // pred_region
      %446 = dma.done [#allocation4], 128
    $region61: #{tpu_custom_call.1} parent=1 // pred_fallthru
      _
    %447 = vsyncpa [#allocation3], 1
    %448 = vsyncpa [#allocation6], 1
    %449 = vsyncpa [#allocation9], 1
    %450 = vsyncpa [#allocation4], 1

</llo_original>
